<compile_context>
chip_gen: v7x
topology: tpu7x:2x2x1
jax: 0.10.0
libtpu: 0.0.40
codegen_flags: <defaults>
</compile_context>

<pallas_src>
import jax
import jax.numpy as jnp
import numpy as np
from jax.experimental import pallas as pl
from jax.experimental.pallas import tpu as pltpu


def _imgembed_kernel(x_ref, w_ref, b_ref, o_ref):
    """(TM, K) @ (K, N) + (1, N) -> (TM, N), accumulated in f32 on the MXU."""
    acc = jnp.dot(x_ref[...], w_ref[...], preferred_element_type=jnp.float32)
    o_ref[...] = (acc + b_ref[...]).astype(o_ref.dtype)


def img_embed_forward(x, weight, bias, num_patches_w, num_patches_h, patch_size,
                      *, tile_m=256, compute_dtype=jnp.bfloat16):
    """Pallas equivalent of ImgEmbed.forward.

    x:      (B, S, E)      with S == num_patches_h * num_patches_w
    weight: (E, C, P, P)   PyTorch ConvTranspose2d weight layout
    bias:   (C,)
    returns (B, C, num_patches_h*P, num_patches_w*P)  (NCHW, like PyTorch)
    """
    B, S, E = x.shape
    E_w, C, P, P2 = weight.shape
    assert E_w == E and P == patch_size and P2 == patch_size
    assert S == num_patches_h * num_patches_w

    M = B * S
    N = C * P * P
    out_dtype = x.dtype

    # --- tile size: sublane-aligned for the compute dtype (bf16 packs 16 rows/vreg)
    row_align = 8 * max(1, 4 // jnp.dtype(compute_dtype).itemsize)
    tm = min(tile_m, M)
    if tm != M:
        tm = max(row_align, (tm // row_align) * row_align)
    grid_m = pl.cdiv(M, tm)

    # --- operands (reshapes below are adjacent-dim merges: free, no HBM copy)
    x2d = x.reshape(M, E).astype(compute_dtype)          # (M, K) bf16
    w_flat = weight.reshape(E, N).astype(compute_dtype)  # (K, N) bf16, VMEM-resident
    # bias[c] applies to every pixel (i, j) of channel c's patch; keep f32.
    b_flat = jnp.broadcast_to(
        bias.astype(jnp.float32)[:, None, None], (C, P, P)).reshape(1, N)

    # --- explicit VMEM budget (double-buffered X/O tiles + resident W + bias)
    cd_bytes = jnp.dtype(compute_dtype).itemsize
    out_bytes = jnp.dtype(out_dtype).itemsize
    needed = (2 * tm * E * cd_bytes        # X tiles (double-buffered)
              + 2 * E * N * cd_bytes       # weight (counted 2x for safety)
              + 2 * N * 4                  # bias
              + 2 * tm * N * out_bytes)    # output tiles (double-buffered)
    vmem_limit = int(min(64 * 2**20, max(needed + 8 * 2**20, 32 * 2**20)))

    out2d = pl.pallas_call(
        _imgembed_kernel,
        out_shape=jax.ShapeDtypeStruct((M, N), out_dtype),
        grid=(grid_m,),
        in_specs=[
            pl.BlockSpec((tm, E), lambda i: (i, 0)),   # streamed per tile
            pl.BlockSpec((E, N), lambda i: (0, 0)),    # resident weight
            pl.BlockSpec((1, N), lambda i: (0, 0)),    # resident bias
        ],
        out_specs=pl.BlockSpec((tm, N), lambda i: (i, 0)),
        compiler_params=pltpu.CompilerParams(
            dimension_semantics=("parallel",),          # v7x: split tiles across 2 TCs
            vmem_limit_bytes=vmem_limit,
        ),
    )(x2d, w_flat, b_flat)

    # Glue: scatter each token's (C, P, P) patch into the NCHW image (XLA).
    out = out2d.reshape(B, num_patches_h, num_patches_w, C, P, P)
    out = out.transpose(0, 3, 1, 4, 2, 5)               # (B, C, Hp, P, Wp, P)
    out = out.reshape(B, C, num_patches_h * P, num_patches_w * P)
    return out


if __name__ == "__main__":
    # Small shapes consistent with the module (module defaults: P=16, C=3, E=768).
    patch_size = 8
    in_chans = 4
    embed_dim = 128
    B = 2
    num_patches_h = 8
    num_patches_w = 8
    S = num_patches_h * num_patches_w           # 64 -> M = 128, N = 256 (lane-dense)

    key = jax.random.PRNGKey(0)
    kx, kw, kb = jax.random.split(key, 3)

    x = jax.random.normal(kx, (B, S, embed_dim), dtype=jnp.float32)
    weight = 0.02 * jax.random.normal(
        kw, (embed_dim, in_chans, patch_size, patch_size), dtype=jnp.float32)
    bias = 0.01 * jax.random.normal(kb, (in_chans,), dtype=jnp.float32)

    # tile_m=64 so the test exercises a multi-step (pipelined) grid: grid=(2,).
    out = img_embed_forward(x, weight, bias, num_patches_w, num_patches_h,
                            patch_size, tile_m=64)
    out = jax.block_until_ready(out)

    # Pure-JAX reference computed from the same bf16-rounded inputs
    # (kernel casts x/W to bf16; accumulation is f32 in both paths).
    xq = x.astype(jnp.bfloat16).astype(jnp.float32)
    wq = weight.astype(jnp.bfloat16).astype(jnp.float32)
    ref_patches = jnp.einsum("bse,ecij->bscij", xq, wq) + bias[None, None, :, None, None]
    ref = ref_patches.reshape(B, num_patches_h, num_patches_w,
                              in_chans, patch_size, patch_size)
    ref = ref.transpose(0, 3, 1, 4, 2, 5).reshape(
        B, in_chans, num_patches_h * patch_size, num_patches_w * patch_size)

    assert out.shape == (B, in_chans,
                         num_patches_h * patch_size, num_patches_w * patch_size)
    np.testing.assert_allclose(np.asarray(out), np.asarray(ref), rtol=1e-3, atol=1e-3)

    print("KERNEL_OK")
</pallas_src>

<mosaic_0001>
module attributes {stable_mosaic.version = 11 : i64} {
  func.func @_imgembed_kernel(%arg0: i32, %arg1: memref<64x128xbf16, #tpu.memory_space<vmem>>, %arg2: memref<128x256xbf16, #tpu.memory_space<vmem>>, %arg3: memref<1x256xf32, #tpu.memory_space<vmem>>, %arg4: memref<64x256xf32, #tpu.memory_space<vmem>>) attributes {dimension_semantics = [#tpu.dimension_semantics<parallel>], iteration_bounds = array<i64: 2>, scalar_prefetch = 0 : i64, scratch_operands = 0 : i64, tpu.core_type = #tpu.core_type<tc>, window_params = [{transform_indices = @transform_0, window_bounds = array<i64: 64, 128>}, {pipeline_mode = #tpu.pipeline_mode<synchronous>, transform_indices = @transform_1, window_bounds = array<i64: 128, 256>}, {pipeline_mode = #tpu.pipeline_mode<synchronous>, transform_indices = @transform_2, window_bounds = array<i64: 1, 256>}, {transform_indices = @transform_3, window_bounds = array<i64: 64, 256>}]} {
    %c0 = arith.constant 0 : index
    %c0_0 = arith.constant 0 : index
    %0 = vector.load %arg1[%c0, %c0_0] : memref<64x128xbf16, #tpu.memory_space<vmem>>, vector<64x128xbf16>
    %c0_1 = arith.constant 0 : index
    %c0_2 = arith.constant 0 : index
    %1 = vector.load %arg2[%c0_1, %c0_2] : memref<128x256xbf16, #tpu.memory_space<vmem>>, vector<128x256xbf16>
    %cst = arith.constant dense<0.000000e+00> : vector<64x256xf32>
    %2 = tpu.matmul %0, %1, %cst {dimension_numbers = #tpu.dot_dimension_numbers<[1], [0], [0], [1], [0, 0, 1, 1], [], []>} : vector<64x128xbf16>, vector<128x256xbf16>, vector<64x256xf32> -> vector<64x256xf32>
    %c0_3 = arith.constant 0 : index
    %c0_4 = arith.constant 0 : index
    %3 = vector.load %arg3[%c0_3, %c0_4] : memref<1x256xf32, #tpu.memory_space<vmem>>, vector<1x256xf32>
    %4 = vector.broadcast %3 : vector<1x256xf32> to vector<64x256xf32>
    %5 = arith.addf %2, %4 : vector<64x256xf32>
    %c0_5 = arith.constant 0 : index
    %c0_6 = arith.constant 0 : index
    %6 = vector.load %arg4[%c0_5, %c0_6] : memref<64x256xf32, #tpu.memory_space<vmem>>, vector<64x256xf32>
    tpu.vector_store %arg4[%c0_5, %c0_6], %5 {strides = array<i32>} : memref<64x256xf32, #tpu.memory_space<vmem>>, vector<64x256xf32>,
    return
  }
  func.func @transform_0(%arg0: i32) -> (i32, i32) {
    %c0_i32 = arith.constant 0 : i32
    %c0_i32_0 = arith.constant 0 : i32
    return %arg0, %c0_i32 : i32, i32
  }
  func.func @transform_1(%arg0: i32) -> (i32, i32) {
    %c0_i32 = arith.constant 0 : i32
    %c0_i32_0 = arith.constant 0 : i32
    %c0_i32_1 = arith.constant 0 : i32
    return %c0_i32, %c0_i32_0 : i32, i32
  }
  func.func @transform_2(%arg0: i32) -> (i32, i32) {
    %c0_i32 = arith.constant 0 : i32
    %c0_i32_0 = arith.constant 0 : i32
    %c0_i32_1 = arith.constant 0 : i32
    return %c0_i32, %c0_i32_0 : i32, i32
  }
  func.func @transform_3(%arg0: i32) -> (i32, i32) {
    %c0_i32 = arith.constant 0 : i32
    %c0_i32_0 = arith.constant 0 : i32
    return %arg0, %c0_i32 : i32, i32
  }
}

</mosaic_0001>

<llo_original>
// kernel: tpu_custom_call.1
$region0: #{tpu_custom_call.1}
  #allocation0 [shape = 'u32[]', space=smem, size = 0x4, offset = 0x4, fixed_abs, tag = 'smem constant byte address 0x4 - core index']
  #allocation1 [shape = 'u32[144,128]{1,0:T(1,128)}', space=vmem, size = 0x12000, scoped, tag = 'internal scratch']
  %s0 = inlined_call_operand.hbm [shape: bf16[128,128], index: 0, kind: input, shape index: {}]
  %s1 = inlined_call_operand.hbm [shape: bf16[128,256], index: 1, kind: input, shape index: {}]
  %s2 = inlined_call_operand.vmem [shape: f32[1,256], index: 2, kind: input, shape index: {}]
  %s3 = inlined_call_operand.hbm [shape: f32[128,256], index: 3, kind: output, shape index: {}]
  %s4 = sld [smem:[#allocation0]]
  $region53: #{tpu_custom_call.1} parent=0
    _
  %s6 = ssub.s32 1, %s4
  %s7 = scalar_select 0, %s6, %s4
  $region1: #{tpu_custom_call.1} parent=0
    #allocation2 [shape = 'u8[32768]{0}', space=vmem, size = 0x8000, scoped, tag = 'input window, operand 0']
    #allocation3 [shape = 's32[2]{0}', space=sflag, size = 0x8, scoped, tag = 'scoped memory for tpu_custom_call.1']
    #allocation4 [shape = 's32[2]{0}', space=sflag, size = 0x8, scoped, tag = 'scoped memory for tpu_custom_call.1']
    #allocation5 [shape = 'u8[65536]{0}', space=vmem, size = 0x10000, scoped, tag = 'input window, operand 1, single buffered']
    #allocation6 [shape = 's32[1]{0}', space=sflag, size = 0x4, scoped, tag = 'scoped memory for tpu_custom_call.1']
    #allocation7 [shape = 'u8[131072]{0}', space=vmem, size = 0x20000, scoped, tag = 'output window, operand 0']
    %8 = vsyncpa [#allocation3], 0
    %s9 = scalar_lea.sflag [#allocation3], 1
    %10 = vsyncpa %s9, 0
    %11 = vsyncpa [#allocation6], 0
    %12 = vsyncpa [#allocation4], 0
    %s13 = scalar_lea.sflag [#allocation4], 1
    %14 = vsyncpa %s13, 0
    loop: start=0, step=1, limit=4
    $region2: #{tpu_custom_call.1} parent=1 // loop_pre_header
      _
    $region3: #{tpu_custom_call.1} parent=1 // loop_header
      %s16 = sphi 0, %s20
      %p17 = scmp.ge.s32.totalorder %s16, 4
      %s26 = sphi 0, %s28
      %s29 = sphi 0, %s26
      %s30 = sphi 0, %s29
      %s46 = sphi 0, %s30
      %s50 = sphi 0, %s50
      %s52 = sphi 0, %s50
      %s53 = sphi 0, %s52
      %s67 = sphi 0, %s53
      %s71 = sphi 0, %s71
      %s73 = sphi 0, %s71
      %s74 = sphi 0, %s73
      %s88 = sphi 0, %s74
      %s94 = sphi 0, %s96
      %s97 = sphi 0, %s94
      %s98 = sphi 0, %s97
      %s114 = sphi 0, %s98
    $region4: #{tpu_custom_call.1} parent=1 // loop_header_branch
      %19 = sbr.rel (%p17) target = $region8
    $region5: #{tpu_custom_call.1} parent=1 // loop_body
      %s21 = ssub.s32 %s16, 1
      %s22 = ssub.s32 %s16, 2
      %s23 = sadd.s32 %s16, 1
      %s24 = ssub.s32 %s16, %s23
      %p25 = scmp.eq.s32.totalorder %s24, 0
      %s27 = sadd.s32 %s26, 1
      %s28 = scalar_select %p25, %s26, %s27
      %p31 = pneg %p25
      %p32 = scmp.eq.s32.totalorder %s16, 1
      %p33 = por %p31, %p32
      %p34 = scmp.ne.s32.totalorder %s26, %s29
      %p35 = scmp.eq.s32.totalorder %s16, 0
      %p36 = por %p34, %p35
      %p37 = scmp.ne.s32.totalorder %s26, %s29
      %p38 = scmp.eq.s32.totalorder %s21, 1
      %p39 = por %p37, %p38
      %p40 = scmp.ne.s32.totalorder %s29, %s30
      %p41 = scmp.eq.s32.totalorder %s21, 0
      %p42 = por %p40, %p41
      %p43 = scmp.ne.s32.totalorder %s29, %s30
      %p44 = scmp.eq.s32.totalorder %s22, 1
      %p45 = por %p43, %p44
      %p47 = scmp.ne.s32.totalorder %s30, %s46
      %p48 = scmp.eq.s32.totalorder %s22, 0
      %p49 = por %p47, %p48
      %s51 = sadd.s32 %s50, 1
      %p54 = scmp.eq.s32.totalorder %s16, 1
      %p55 = scmp.ne.s32.totalorder %s50, %s52
      %p56 = scmp.eq.s32.totalorder %s16, 0
      %p57 = por %p55, %p56
      %p58 = scmp.ne.s32.totalorder %s50, %s52
      %p59 = scmp.eq.s32.totalorder %s21, 1
      %p60 = por %p58, %p59
      %p61 = scmp.ne.s32.totalorder %s52, %s53
      %p62 = scmp.eq.s32.totalorder %s21, 0
      %p63 = por %p61, %p62
      %p64 = scmp.ne.s32.totalorder %s52, %s53
      %p65 = scmp.eq.s32.totalorder %s22, 1
      %p66 = por %p64, %p65
      %p68 = scmp.ne.s32.totalorder %s53, %s67
      %p69 = scmp.eq.s32.totalorder %s22, 0
      %p70 = por %p68, %p69
      %s72 = sadd.s32 %s71, 1
      %p75 = scmp.eq.s32.totalorder %s16, 1
      %p76 = scmp.ne.s32.totalorder %s71, %s73
      %p77 = scmp.eq.s32.totalorder %s16, 0
      %p78 = por %p76, %p77
      %p79 = scmp.ne.s32.totalorder %s71, %s73
      %p80 = scmp.eq.s32.totalorder %s21, 1
      %p81 = por %p79, %p80
      %p82 = scmp.ne.s32.totalorder %s73, %s74
      %p83 = scmp.eq.s32.totalorder %s21, 0
      %p84 = por %p82, %p83
      %p85 = scmp.ne.s32.totalorder %s73, %s74
      %p86 = scmp.eq.s32.totalorder %s22, 1
      %p87 = por %p85, %p86
      %p89 = scmp.ne.s32.totalorder %s74, %s88
      %p90 = scmp.eq.s32.totalorder %s22, 0
      %p91 = por %p89, %p90
      %s92 = ssub.s32 %s16, %s23
      %p93 = scmp.eq.s32.totalorder %s92, 0
      %s95 = sadd.s32 %s94, 1
      %s96 = scalar_select %p93, %s94, %s95
      %p99 = pneg %p93
      %p100 = scmp.eq.s32.totalorder %s16, 1
      %p101 = por %p99, %p100
      %p102 = scmp.ne.s32.totalorder %s94, %s97
      %p103 = scmp.eq.s32.totalorder %s16, 0
      %p104 = por %p102, %p103
      %p105 = scmp.ne.s32.totalorder %s94, %s97
      %p106 = scmp.eq.s32.totalorder %s21, 1
      %p107 = por %p105, %p106
      %p108 = scmp.ne.s32.totalorder %s97, %s98
      %p109 = scmp.eq.s32.totalorder %s21, 0
      %p110 = por %p108, %p109
      %p111 = scmp.ne.s32.totalorder %s97, %s98
      %p112 = scmp.eq.s32.totalorder %s22, 1
      %p113 = por %p111, %p112
      %p115 = scmp.ne.s32.totalorder %s98, %s114
      %p116 = scmp.eq.s32.totalorder %s22, 0
      %p117 = por %p115, %p116
      %p118 = scmp.le.s32.totalorder 1, %s16
      %p119 = scmp.lt.s32.totalorder %s16, 3
      %p120 = pnand %p118, %p119
      %p121 = pneg %p120
      // Predicated region
      $region9: #{tpu_custom_call.1} parent=5 // pred_check
        _
      $region10: #{tpu_custom_call.1} parent=5 // pred_check_branch
        %123 = sbr.rel (%p120) target = $region12
      $region11: #{tpu_custom_call.1} parent=5 // pred_region
        %s124 = ssub.s32 %s16, 1
        // Predicated region
        $region13: #{tpu_custom_call.1} parent=11 // pred_check
          %p125 = pneg %p63
        $region14: #{tpu_custom_call.1} parent=11 // pred_check_branch
          %127 = sbr.rel (%p125) target = $region16
        $region15: #{tpu_custom_call.1} parent=11 // pred_region
          %s129 = ssub.s32 2048, 2048
          %130 = vsyncadd [#allocation6], %s129
          %s131 = sshll.u32 [#allocation5], 4
          %s132 = int_to_ptr.vmem [resolvable:$true] %s131
          %137 = dma.hbm_to_vmem [thread:$0]  %s1, 2048, %s132, [#allocation6], 128, 128, 8
        $region16: #{tpu_custom_call.1} parent=11 // pred_fallthru
          _
        // Predicated region
        $region17: #{tpu_custom_call.1} parent=11 // pred_check
          %p138 = pneg %p84
        $region18: #{tpu_custom_call.1} parent=11 // pred_check_branch
          %140 = sbr.rel (%p138) target = $region20
        $region19: #{tpu_custom_call.1} parent=11 // pred_region
          _
        $region20: #{tpu_custom_call.1} parent=11 // pred_fallthru
          _
      $region12: #{tpu_custom_call.1} parent=5 // pred_fallthru
        _
      %p141 = scmp.lt.s32.totalorder %s16, 2
      // Predicated region
      $region21: #{tpu_custom_call.1} parent=5 // pred_check
        %p142 = pneg %p141
      $region22: #{tpu_custom_call.1} parent=5 // pred_check_branch
        %144 = sbr.rel (%p142) target = $region24
      $region23: #{tpu_custom_call.1} parent=5 // pred_region
        // Predicated region
        $region25: #{tpu_custom_call.1} parent=23 // pred_check
          %p145 = pneg %p36
        $region26: #{tpu_custom_call.1} parent=23 // pred_check_branch
          %147 = sbr.rel (%p145) target = $region28
        $region27: #{tpu_custom_call.1} parent=23 // pred_region
          %s148 = sand.u32 %s26, 1
          %s149 = scalar_lea.sflag [#allocation3], %s148
          %s150 = sand.u32 %s26, 1
          %s151 = smul.addr %s150, 32
          %s152 = scalar_lea.vmem [#allocation2], %s151
          %s153 = smul.u32 8, %s16
          %s155 = ssub.s32 512, 512
          %156 = vsyncadd %s149, %s155
          %s157 = smul.addr %s153, 64
          %s158 = scalar_lea.hbm %s0, %s157
          %s159 = sshll.u32 %s152, 4
          %s160 = int_to_ptr.vmem [resolvable:$true] %s159
          %165 = dma.hbm_to_vmem [thread:$0]  %s158, 512, %s160, %s149, 64, 64, 4
        $region28: #{tpu_custom_call.1} parent=23 // pred_fallthru
          _
      $region24: #{tpu_custom_call.1} parent=5 // pred_fallthru
        _
      %p166 = scmp.le.s32.totalorder 1, %s16
      %p167 = scmp.lt.s32.totalorder %s16, 3
      %p168 = pnand %p166, %p167
      %p169 = pneg %p168
      // Predicated region
      $region29: #{tpu_custom_call.1} parent=5 // pred_check
        _
      $region30: #{tpu_custom_call.1} parent=5 // pred_check_branch
        %171 = sbr.rel (%p168) target = $region32
      $region31: #{tpu_custom_call.1} parent=5 // pred_region
        %s172 = ssub.s32 %s16, 1
        %s173 = sand.u32 %s29, 1
        %s174 = scalar_lea.sflag [#allocation3], %s173
        %s175 = sand.u32 %s29, 1
        %s176 = smul.addr %s175, 32
        %s177 = scalar_lea.vmem [#allocation2], %s176
        // Predicated region
        $region33: #{tpu_custom_call.1} parent=31 // pred_check
          %p178 = pneg %p42
        $region34: #{tpu_custom_call.1} parent=31 // pred_check_branch
          %180 = sbr.rel (%p178) target = $region36
        $region35: #{tpu_custom_call.1} parent=31 // pred_region
          %181 = dma.done %s174, 512
        $region36: #{tpu_custom_call.1} parent=31 // pred_fallthru
          _
        // Predicated region
        $region37: #{tpu_custom_call.1} parent=31 // pred_check
          %p182 = pneg %p63
        $region38: #{tpu_custom_call.1} parent=31 // pred_check_branch
          %184 = sbr.rel (%p182) target = $region40
        $region39: #{tpu_custom_call.1} parent=31 // pred_region
          %185 = dma.done [#allocation6], 2048
        $region40: #{tpu_custom_call.1} parent=31 // pred_fallthru
          _
        %s186 = sand.u32 %s29, 1
        %s187 = scalar_lea.sflag [#allocation3], %s186
        %s188 = sand.u32 %s29, 1
        %s189 = smul.addr %s188, 32
        %s190 = scalar_lea.vmem [#allocation2], %s189
        %p191 = pneg %p42
        %p192 = pneg %p39
        %p193 = pneg %p63
        %p194 = pneg %p60
        %p195 = pneg %p84
        %p196 = pneg %p81
        %p197 = pneg %p110
        %p198 = pneg %p107
        %s199 = sand.u32 %s97, 1
        %s200 = scalar_lea.sflag [#allocation4], %s199
        %s201 = sand.u32 %s97, 1
        %s202 = smul.addr %s201, 128
        %s203 = scalar_lea.vmem [#allocation7], %s202
        %s204 = smul.u32 8, %s21
        %s205 = smul.u32 8, %s21
        %v207 = vld [vmem:[%s177] sm:$0xf]
        %v208 = vld [vmem:[%s177 + $0x4] sm:$0xf]
        %v209 = vld [vmem:[%s177 + $0x8] sm:$0xf]
        %v210 = vld [vmem:[%s177 + $0xc] sm:$0xf]
        %v211 = vld [vmem:[%s177 + $0x10] sm:$0xf]
        %v212 = vld [vmem:[%s177 + $0x14] sm:$0xf]
        %v213 = vld [vmem:[%s177 + $0x18] sm:$0xf]
        %v214 = vld [vmem:[%s177 + $0x1c] sm:$0xf]
        %v215 = vld [vmem:[#allocation5] sm:$0xff]
        %v216 = vld [vmem:[#allocation5 + $0x8] sm:$0xff]
        %v217 = vld [vmem:[#allocation5 + $0x10] sm:$0xff]
        %v218 = vld [vmem:[#allocation5 + $0x18] sm:$0xff]
        %v219 = vld [vmem:[#allocation5 + $0x20] sm:$0xff]
        %v220 = vld [vmem:[#allocation5 + $0x28] sm:$0xff]
        %v221 = vld [vmem:[#allocation5 + $0x30] sm:$0xff]
        %v222 = vld [vmem:[#allocation5 + $0x38] sm:$0xff]
        %v223 = vld [vmem:[#allocation5 + $0x40] sm:$0xff]
        %v224 = vld [vmem:[#allocation5 + $0x48] sm:$0xff]
        %v225 = vld [vmem:[#allocation5 + $0x50] sm:$0xff]
        %v226 = vld [vmem:[#allocation5 + $0x58] sm:$0xff]
        %v227 = vld [vmem:[#allocation5 + $0x60] sm:$0xff]
        %v228 = vld [vmem:[#allocation5 + $0x68] sm:$0xff]
        %v229 = vld [vmem:[#allocation5 + $0x70] sm:$0xff]
        %v230 = vld [vmem:[#allocation5 + $0x78] sm:$0xff]
        %v231 = vld [vmem:[%s2] sm:$0x3]
        %v233 = vlaneseq
        %v234 = vshrl.u32 %v233, 7
        %v235 = vsub.s32 0, %v234
        %v236 = vrot.slane %v231, %v235
        %v237 = vlaneseq
        %v238 = vshrl.u32 %v237, 7
        %v239 = vsub.s32 1, %v238
        %v240 = vrot.slane %v231, %v239
        %v251 = vunpack.c.l.b16 %v207
        %v252 = vunpack.c.l.b16 %v208
        %v253 = vunpack.c.l.b16 %v209
        %v254 = vunpack.c.l.b16 %v210
        %v255 = vunpack.c.l.b16 %v211
        %v256 = vunpack.c.l.b16 %v212
        %v257 = vunpack.c.l.b16 %v213
        %v258 = vunpack.c.l.b16 %v214
        %v259 = vpack.c.b16 %v252, %v251
        %v260 = vpack.c.b16 %v254, %v253
        %v261 = vpack.c.b16 %v256, %v255
        %v262 = vpack.c.b16 %v258, %v257
        %v283 = vunpack.c.l.b16 %v215
        %v284 = vunpack.c.h.b16 %v215
        %v285 = vunpack.c.l.b16 %v216
        %v286 = vunpack.c.h.b16 %v216
        %v287 = vunpack.c.l.b16 %v217
        %v288 = vunpack.c.h.b16 %v217
        %v289 = vunpack.c.l.b16 %v218
        %v290 = vunpack.c.h.b16 %v218
        %v291 = vunpack.c.l.b16 %v219
        %v292 = vunpack.c.h.b16 %v219
        %v293 = vunpack.c.l.b16 %v220
        %v294 = vunpack.c.h.b16 %v220
        %v295 = vunpack.c.l.b16 %v221
        %v296 = vunpack.c.h.b16 %v221
        %v297 = vunpack.c.l.b16 %v222
        %v298 = vunpack.c.h.b16 %v222
        %v299 = vunpack.c.l.b16 %v223
        %v300 = vunpack.c.h.b16 %v223
        %v301 = vunpack.c.l.b16 %v224
        %v302 = vunpack.c.h.b16 %v224
        %v303 = vunpack.c.l.b16 %v225
        %v304 = vunpack.c.h.b16 %v225
        %v305 = vunpack.c.l.b16 %v226
        %v306 = vunpack.c.h.b16 %v226
        %v307 = vunpack.c.l.b16 %v227
        %v308 = vunpack.c.h.b16 %v227
        %v309 = vunpack.c.l.b16 %v228
        %v310 = vunpack.c.h.b16 %v228
        %v311 = vunpack.c.l.b16 %v229
        %v312 = vunpack.c.h.b16 %v229
        %v313 = vunpack.c.l.b16 %v230
        %v314 = vunpack.c.h.b16 %v230
        %v315 = vpack.c.b16 %v285, %v283
        %v316 = vpack.c.b16 %v286, %v284
        %v317 = vpack.c.b16 %v289, %v287
        %v318 = vpack.c.b16 %v290, %v288
        %v319 = vpack.c.b16 %v293, %v291
        %v320 = vpack.c.b16 %v294, %v292
        %v321 = vpack.c.b16 %v297, %v295
        %v322 = vpack.c.b16 %v298, %v296
        %v323 = vpack.c.b16 %v301, %v299
        %v324 = vpack.c.b16 %v302, %v300
        %v325 = vpack.c.b16 %v305, %v303
        %v326 = vpack.c.b16 %v306, %v304
        %v327 = vpack.c.b16 %v309, %v307
        %v328 = vpack.c.b16 %v310, %v308
        %v329 = vpack.c.b16 %v313, %v311
        %v330 = vpack.c.b16 %v314, %v312
        %347 = vmatprep.subr.bf16.mxu0 %v316
        %348 = vmatpush1.bf16.msra.mxu0 %v315
        %349 = vmatprep.subr.bf16.mxu0 %v318
        %350 = vmatpush1.bf16.msra.mxu0 %v317
        %351 = vmatprep.subr.bf16.mxu0 %v320
        %352 = vmatpush1.bf16.msra.mxu0 %v319
        %353 = vmatprep.subr.bf16.mxu0 %v322
        %354 = vmatpush1.bf16.msra.mxu0 %v321
        %355 = vmatprep.subr.bf16.mxu0 %v324
        %356 = vmatpush1.bf16.msra.mxu0 %v323
        %357 = vmatprep.subr.bf16.mxu0 %v326
        %358 = vmatpush1.bf16.msra.mxu0 %v325
        %359 = vmatprep.subr.bf16.mxu0 %v328
        %360 = vmatpush1.bf16.msra.mxu0 %v327
        %361 = vmatprep.subr.bf16.mxu0 %v330
        %362 = vmatpush1.bf16.msra.mxu0 %v329
        %363 = vmatprep.subr.bf16.mxu0 0
        %364 = vmatpush1.bf16.msra.mxu0 0
        %365 = vmatprep.subr.bf16.mxu0 0
        %366 = vmatpush1.bf16.msra.mxu0 0
        %367 = vmatprep.subr.bf16.mxu0 0
        %368 = vmatpush1.bf16.msra.mxu0 0
        %369 = vmatprep.subr.bf16.mxu0 0
        %370 = vmatpush1.bf16.msra.mxu0 0
        %371 = vmatprep.subr.bf16.mxu0 0
        %372 = vmatpush1.bf16.msra.mxu0 0
        %373 = vmatprep.subr.bf16.mxu0 0
        %374 = vmatpush1.bf16.msra.mxu0 0
        %375 = vmatprep.subr.bf16.mxu0 0
        %376 = vmatpush1.bf16.msra.mxu0 0
        %377 = vmatprep.subr.bf16.mxu0 0
        %378 = vmatpush1.bf16.msra.mxu0 0
        %379 = vmatprep.mubr.bf16.mxu0 0
        %380 = vmatmul.mubr.bf16.gmra.mrb[0].mxu0 %v259
        %v381 = vpop.f32.mrb[0].mxu0
        %v382 = vadd.f32 %v236, %v381
        %v383 = vpop.f32.mrb[0].mxu0
        %v384 = vadd.f32 %v240, %v383
        %v385 = vpop.f32.mrb[0].mxu0
        %v386 = vadd.f32 %v236, %v385
        %v387 = vpop.f32.mrb[0].mxu0
        %v388 = vadd.f32 %v240, %v387
        %389 = vmatprep.mubr.bf16.mxu0 0
        %390 = vmatmul.mubr.bf16.gmra.mrb[0].mxu0 %v260
        %v391 = vpop.f32.mrb[0].mxu0
        %v392 = vadd.f32 %v236, %v391
        %v393 = vpop.f32.mrb[0].mxu0
        %v394 = vadd.f32 %v240, %v393
        %v395 = vpop.f32.mrb[0].mxu0
        %v396 = vadd.f32 %v236, %v395
        %v397 = vpop.f32.mrb[0].mxu0
        %v398 = vadd.f32 %v240, %v397
        %399 = vmatprep.mubr.bf16.mxu0 0
        %400 = vmatmul.mubr.bf16.gmra.mrb[0].mxu0 %v261
        %v401 = vpop.f32.mrb[0].mxu0
        %v402 = vadd.f32 %v236, %v401
        %v403 = vpop.f32.mrb[0].mxu0
        %v404 = vadd.f32 %v240, %v403
        %v405 = vpop.f32.mrb[0].mxu0
        %v406 = vadd.f32 %v236, %v405
        %v407 = vpop.f32.mrb[0].mxu0
        %v408 = vadd.f32 %v240, %v407
        %409 = vmatprep.mubr.bf16.mxu0 0
        %410 = vmatmul.mubr.bf16.gmra.mrb[0].mxu0 %v262
        %v411 = vpop.f32.mrb[0].mxu0
        %v412 = vadd.f32 %v236, %v411
        %v413 = vpop.f32.mrb[0].mxu0
        %v414 = vadd.f32 %v240, %v413
        %v415 = vpop.f32.mrb[0].mxu0
        %v416 = vadd.f32 %v236, %v415
        %v417 = vpop.f32.mrb[0].mxu0
        %v418 = vadd.f32 %v240, %v417
        %419 = vdwg.mxu0
        %420 = vst [vmem:[%s203] sm:$0xff] %v382
        %421 = vst [vmem:[%s203 + $0x8] sm:$0xff] %v384
        %422 = vst [vmem:[%s203 + $0x10] sm:$0xff] %v386
        %423 = vst [vmem:[%s203 + $0x18] sm:$0xff] %v388
        %424 = vst [vmem:[%s203 + $0x20] sm:$0xff] %v392
        %425 = vst [vmem:[%s203 + $0x28] sm:$0xff] %v394
        %426 = vst [vmem:[%s203 + $0x30] sm:$0xff] %v396
        %427 = vst [vmem:[%s203 + $0x38] sm:$0xff] %v398
        %428 = vst [vmem:[%s203 + $0x40] sm:$0xff] %v402
        %429 = vst [vmem:[%s203 + $0x48] sm:$0xff] %v404
        %430 = vst [vmem:[%s203 + $0x50] sm:$0xff] %v406
        %431 = vst [vmem:[%s203 + $0x58] sm:$0xff] %v408
        %432 = vst [vmem:[%s203 + $0x60] sm:$0xff] %v412
        %433 = vst [vmem:[%s203 + $0x68] sm:$0xff] %v414
        %434 = vst [vmem:[%s203 + $0x70] sm:$0xff] %v416
        %435 = vst [vmem:[%s203 + $0x78] sm:$0xff] %v418
        %s436 = sand.u32 %s97, 1
        %s437 = scalar_lea.sflag [#allocation4], %s436
        %s438 = sand.u32 %s97, 1
        %s439 = smul.addr %s438, 128
        %s440 = scalar_lea.vmem [#allocation7], %s439
        // Predicated region
        $region41: #{tpu_custom_call.1} parent=31 // pred_check
          %p441 = pneg %p107
        $region42: #{tpu_custom_call.1} parent=31 // pred_check_branch
          %443 = sbr.rel (%p441) target = $region44
        $region43: #{tpu_custom_call.1} parent=31 // pred_region
          %s444 = smul.u32 8, %s21
          %s446 = ssub.s32 2048, 2048
          %447 = vsyncadd %s437, %s446
          %s448 = smul.addr %s444, 2
          %s449 = smul.addr %s448, 128
          %s450 = scalar_lea.hbm %s3, %s449
          %s451 = sshll.u32 %s440, 4
          %s452 = int_to_ptr.vmem [resolvable:$true] %s451
          %457 = dma.vmem_to_hbm [thread:$0]  %s452, 2048, %s450, %s437, 256, 256, 16
        $region44: #{tpu_custom_call.1} parent=31 // pred_fallthru
          _
      $region32: #{tpu_custom_call.1} parent=5 // pred_fallthru
        _
      %p458 = scmp.le.s32.totalorder 2, %s16
      // Predicated region
      $region45: #{tpu_custom_call.1} parent=5 // pred_check
        %p459 = pneg %p458
      $region46: #{tpu_custom_call.1} parent=5 // pred_check_branch
        %461 = sbr.rel (%p459) target = $region48
      $region47: #{tpu_custom_call.1} parent=5 // pred_region
        %s462 = ssub.s32 %s16, 2
        // Predicated region
        $region49: #{tpu_custom_call.1} parent=47 // pred_check
          %p463 = pneg %p113
        $region50: #{tpu_custom_call.1} parent=47 // pred_check_branch
          %465 = sbr.rel (%p463) target = $region52
        $region51: #{tpu_custom_call.1} parent=47 // pred_region
          %s466 = sand.u32 %s98, 1
          %s467 = scalar_lea.sflag [#allocation4], %s466
          %s468 = sand.u32 %s98, 1
          %s469 = smul.addr %s468, 128
          %s470 = scalar_lea.vmem [#allocation7], %s469
          %471 = dma.done %s467, 2048
        $region52: #{tpu_custom_call.1} parent=47 // pred_fallthru
          _
      $region48: #{tpu_custom_call.1} parent=5 // pred_fallthru
        _
    $region6: #{tpu_custom_call.1} parent=1 // loop_footer
      %s20 = sadd.s32 1, %s16
    $region7: #{tpu_custom_call.1} parent=1 // loop_footer_branch
      %15 = sbr.rel target = $region3
    $region8: #{tpu_custom_call.1} parent=1 // loop_exit
      _
    %472 = vsyncpa [#allocation3], 1
    %s473 = scalar_lea.sflag [#allocation3], 1
    %474 = vsyncpa %s473, 1
    %475 = vsyncpa [#allocation6], 1
    %476 = vsyncpa [#allocation4], 1
    %s477 = scalar_lea.sflag [#allocation4], 1
    %478 = vsyncpa %s477, 1

</llo_original>
